<compile_context>
chip_gen: v7x
topology: tpu7x:2x2x1
jax: 0.10.0
libtpu: 0.0.40
codegen_flags: <defaults>
</compile_context>

<pallas_src>
import functools

import jax
import jax.numpy as jnp
from jax.experimental import pallas as pl
from jax.experimental.pallas import tpu as pltpu

LANE = 128  # lane width; fused head-2 output / bias are padded to this


def duelling_dqn_kernel(x_ref, w1_ref, w2_ref, w3_ref, b_ref, out_ref, *,
                        action_space):
    h_dim = w1_ref.shape[1]  # hidden = 4 * observation_space (multiple of 128)

    x = x_ref[...].astype(jnp.bfloat16)

    # feature layer 1: (B, O) @ (O, H)
    h = jnp.dot(x, w1_ref[...], preferred_element_type=jnp.float32)
    h = jnp.maximum(h + b_ref[:, 0:h_dim], 0.0).astype(jnp.bfloat16)

    # feature layer 2: (B, H) @ (H, H)   [W2 columns 0:H]
    h = jnp.dot(h, w2_ref[:, 0:h_dim], preferred_element_type=jnp.float32)
    h = jnp.maximum(h + b_ref[:, h_dim:2 * h_dim], 0.0).astype(jnp.bfloat16)

    # fused first layers of advantage & value heads: (B, H) @ (H, 2H)
    #   columns 0:H -> advantage path, columns H:2H -> value path
    av = jnp.dot(h, w2_ref[:, h_dim:3 * h_dim],
                 preferred_element_type=jnp.float32)
    av = jnp.maximum(av + b_ref[:, 2 * h_dim:4 * h_dim], 0.0).astype(jnp.bfloat16)

    # fused (block-diagonal) second layers: (B, 2H) @ (2H, 128)
    #   lanes 0..A-1 : advantage + value (value weights/bias folded into W3)
    #   lane  A      : per-row advantage mean (averaged w_a2 column in W3)
    #   lanes A+1..  : zero padding
    y = jnp.dot(av, w3_ref[...], preferred_element_type=jnp.float32)
    y = y + b_ref[:, 4 * h_dim:4 * h_dim + LANE]

    # duelling combine: the GLOBAL advantage mean (over batch AND actions) is
    # simply the batch-mean of the per-row means already sitting in lane A.
    adv_mean = jnp.mean(y[:, action_space:action_space + 1])

    # lane-dense (B, 128) store; wrapper keeps the first `action_space` cols
    out_ref[...] = y - adv_mean


def pack_params(params, action_space):
    """Pack the 12 nn.Linear params into 4 lane-dense slabs (weights in bf16).

    W3/bias folding (per perf review): the value head's second layer is tiled
    across the advantage lanes (bias added in), and one spare lane carries the
    per-row advantage mean, so the kernel epilogue needs no lane slicing,
    cross-lane reduce or value broadcast.
    """
    (w_f1, b_f1, w_f2, b_f2,
     w_a1, b_a1, w_a2, b_a2,
     w_v1, b_v1, w_v2, b_v2) = params
    h = w_f1.shape[1]
    assert h % LANE == 0, "hidden dim must be a multiple of 128 for aligned slab slices"
    assert action_space + 1 <= LANE, "action_space+1 must fit in one 128-lane tile"

    w1 = w_f1.astype(jnp.bfloat16)                                          # (O, H)
    w2 = jnp.concatenate([w_f2, w_a1, w_v1], axis=1).astype(jnp.bfloat16)   # (H, 3H)

    # fused second head layer, lane-padded to 128 outputs:
    #   rows 0:H  (adv hidden) : lanes 0:A -> w_a2,        lane A -> mean column of w_a2
    #   rows H:2H (val hidden) : lanes 0:A -> w_v2 (tiled), lane A -> 0
    w3 = jnp.zeros((2 * h, LANE), jnp.float32)
    w3 = w3.at[:h, :action_space].set(w_a2)
    w3 = w3.at[h:, :action_space].set(jnp.tile(w_v2, (1, action_space)))
    w3 = w3.at[:h, action_space:action_space + 1].set(
        jnp.sum(w_a2, axis=1, keepdims=True) / action_space)
    w3 = w3.astype(jnp.bfloat16)                                            # (2H, 128)

    b_av2 = jnp.zeros((1, LANE), jnp.float32)
    b_av2 = b_av2.at[:, :action_space].set(b_a2 + b_v2)                     # adv+val bias
    b_av2 = b_av2.at[:, action_space:action_space + 1].set(
        jnp.sum(b_a2, axis=1, keepdims=True) / action_space)                # mean-lane bias
    b_all = jnp.concatenate([b_f1, b_f2, b_a1, b_v1, b_av2], axis=1)        # (1, 4H+128) f32

    return w1, w2, w3, b_all


@functools.partial(jax.jit, static_argnums=(2,))
def duelling_dqn_forward(x, packed_params, action_space):
    """x: (B, observation_space) f32. packed_params: output of pack_params.

    jit-wrapped: the pallas_call and the trailing action-slice are a single
    dispatch. Batch as many observations as possible per call — the kernel is
    launch/DMA-bound, so throughput scales ~linearly with B.
    """
    batch = x.shape[0]
    w1, w2, w3, b_all = packed_params
    hidden = w1.shape[1]

    # --- VMEM guardrail (no grid => all operands resident at once) -----------
    # bf16 weights + f32 bias + activations, 2x headroom for Mosaic temps.
    weight_bytes = 2 * (w1.size + w2.size + w3.size) + 4 * b_all.size
    act_bytes = batch * (4 * x.shape[1] + 2 * 3 * hidden + 4 * 2 * LANE)
    footprint = 2 * (weight_bytes + act_bytes)
    compiler_params = None
    if footprint > 12 * 1024 * 1024:
        # TODO(synk): past ~48 MiB (hidden >= ~4096) this exceeds v7x's 64 MiB
        # physical VMEM; switch to a K-tiled grid (reduction axis last,
        # "arbitrary", f32 acc scratch with pl.when init/finalize) for that
        # regime instead of raising the limit further.
        compiler_params = pltpu.CompilerParams(
            vmem_limit_bytes=min(footprint, 60 * 1024 * 1024))

    vmem = pl.BlockSpec(memory_space=pltpu.MemorySpace.VMEM)
    kernel = functools.partial(duelling_dqn_kernel, action_space=action_space)

    out_padded = pl.pallas_call(
        kernel,
        out_shape=jax.ShapeDtypeStruct((batch, LANE), jnp.float32),
        in_specs=[vmem] * 5,
        out_specs=vmem,
        compiler_params=compiler_params,
    )(x, w1, w2, w3, b_all)
    # lanes >= action_space of the padded slab are garbage by construction
    return out_padded[:, :action_space]


def init_params(key, observation_space, action_space):
    """Deterministic init mimicking nn.Linear default (uniform +/- 1/sqrt(fan_in)).
    Weights stored transposed relative to PyTorch: shape (in, out), f32."""
    hidden = observation_space * 4

    def linear(key, fan_in, fan_out):
        kw, kb = jax.random.split(key)
        bound = 1.0 / jnp.sqrt(fan_in)
        w = jax.random.uniform(kw, (fan_in, fan_out), jnp.float32, -bound, bound)
        b = jax.random.uniform(kb, (1, fan_out), jnp.float32, -bound, bound)
        return w, b

    keys = jax.random.split(key, 6)
    w_f1, b_f1 = linear(keys[0], observation_space, hidden)
    w_f2, b_f2 = linear(keys[1], hidden, hidden)
    w_a1, b_a1 = linear(keys[2], hidden, hidden)
    w_a2, b_a2 = linear(keys[3], hidden, action_space)
    w_v1, b_v1 = linear(keys[4], hidden, hidden)
    w_v2, b_v2 = linear(keys[5], hidden, 1)
    return (w_f1, b_f1, w_f2, b_f2,
            w_a1, b_a1, w_a2, b_a2,
            w_v1, b_v1, w_v2, b_v2)


def reference_forward(x, params):
    """Unfused JAX reference with the same bf16-matmul / f32-accumulate policy.
    (bf16 operands deviate ~1e-2 relative from a pure-f32 PyTorch forward;
    acceptable for Q-value / argmax consumers.)"""
    (w_f1, b_f1, w_f2, b_f2,
     w_a1, b_a1, w_a2, b_a2,
     w_v1, b_v1, w_v2, b_v2) = params

    def mm(a, w):
        return jnp.dot(a.astype(jnp.bfloat16), w.astype(jnp.bfloat16),
                       preferred_element_type=jnp.float32)

    h = jnp.maximum(mm(x, w_f1) + b_f1, 0.0)
    h = jnp.maximum(mm(h, w_f2) + b_f2, 0.0)
    a = jnp.maximum(mm(h, w_a1) + b_a1, 0.0)
    adv = mm(a, w_a2) + b_a2
    v = jnp.maximum(mm(h, w_v1) + b_v1, 0.0)
    val = mm(v, w_v2) + b_v2
    return val + adv - jnp.mean(adv)


if __name__ == "__main__":
    observation_space = 32   # -> hidden = 128
    action_space = 8
    batch = 128              # amortize launch/DMA fixed cost; rows are ~free

    key = jax.random.PRNGKey(0)
    k_params, k_x = jax.random.split(key)

    params = init_params(k_params, observation_space, action_space)
    x = jax.random.normal(k_x, (batch, observation_space), jnp.float32)

    packed = pack_params(params, action_space)
    out = duelling_dqn_forward(x, packed, action_space)
    out = jax.block_until_ready(out)

    ref = reference_forward(x, params)
    assert out.shape == (batch, action_space)
    assert jnp.allclose(out, ref, atol=2e-2, rtol=2e-2), "mismatch vs. JAX reference"

    print("KERNEL_OK")
</pallas_src>

<mosaic_0001>
module attributes {stable_mosaic.version = 11 : i64} {
  func.func @duelling_dqn_kernel(%arg0: memref<128x32xf32, #tpu.memory_space<vmem>>, %arg1: memref<32x128xbf16, #tpu.memory_space<vmem>>, %arg2: memref<128x384xbf16, #tpu.memory_space<vmem>>, %arg3: memref<256x128xbf16, #tpu.memory_space<vmem>>, %arg4: memref<1x640xf32, #tpu.memory_space<vmem>>, %arg5: memref<128x128xf32, #tpu.memory_space<vmem>>) attributes {dimension_semantics = [], scalar_prefetch = 0 : i64, scratch_operands = 0 : i64, tpu.core_type = #tpu.core_type<tc>} {
    %c0 = arith.constant 0 : index
    %c0_0 = arith.constant 0 : index
    %0 = vector.load %arg0[%c0, %c0_0] : memref<128x32xf32, #tpu.memory_space<vmem>>, vector<128x32xf32>
    %1 = arith.truncf %0 : vector<128x32xf32> to vector<128x32xbf16>
    %c0_1 = arith.constant 0 : index
    %c0_2 = arith.constant 0 : index
    %2 = vector.load %arg1[%c0_1, %c0_2] : memref<32x128xbf16, #tpu.memory_space<vmem>>, vector<32x128xbf16>
    %cst = arith.constant dense<0.000000e+00> : vector<128x128xf32>
    %3 = tpu.matmul %1, %2, %cst {dimension_numbers = #tpu.dot_dimension_numbers<[1], [0], [0], [1], [0, 0, 1, 1], [], []>} : vector<128x32xbf16>, vector<32x128xbf16>, vector<128x128xf32> -> vector<128x128xf32>
    %c0_3 = arith.constant 0 : index
    %c0_4 = arith.constant 0 : index
    %4 = vector.load %arg4[%c0_3, %c0_4] : memref<1x640xf32, #tpu.memory_space<vmem>>, vector<1x128xf32>
    %5 = vector.broadcast %4 : vector<1x128xf32> to vector<128x128xf32>
    %6 = arith.addf %3, %5 : vector<128x128xf32>
    %cst_5 = arith.constant 0.000000e+00 : f32
    %7 = vector.broadcast %cst_5 : f32 to vector<128x128xf32>
    %8 = arith.maximumf %6, %7 : vector<128x128xf32>
    %9 = arith.truncf %8 : vector<128x128xf32> to vector<128x128xbf16>
    %c0_6 = arith.constant 0 : index
    %c0_7 = arith.constant 0 : index
    %10 = vector.load %arg2[%c0_6, %c0_7] : memref<128x384xbf16, #tpu.memory_space<vmem>>, vector<128x128xbf16>
    %cst_8 = arith.constant dense<0.000000e+00> : vector<128x128xf32>
    %11 = tpu.matmul %9, %10, %cst_8 {dimension_numbers = #tpu.dot_dimension_numbers<[1], [0], [0], [1], [0, 0, 1, 1], [], []>} : vector<128x128xbf16>, vector<128x128xbf16>, vector<128x128xf32> -> vector<128x128xf32>
    %c0_9 = arith.constant 0 : index
    %c128 = arith.constant 128 : index
    %12 = vector.load %arg4[%c0_9, %c128] : memref<1x640xf32, #tpu.memory_space<vmem>>, vector<1x128xf32>
    %13 = vector.broadcast %12 : vector<1x128xf32> to vector<128x128xf32>
    %14 = arith.addf %11, %13 : vector<128x128xf32>
    %cst_10 = arith.constant 0.000000e+00 : f32
    %15 = vector.broadcast %cst_10 : f32 to vector<128x128xf32>
    %16 = arith.maximumf %14, %15 : vector<128x128xf32>
    %17 = arith.truncf %16 : vector<128x128xf32> to vector<128x128xbf16>
    %c0_11 = arith.constant 0 : index
    %c128_12 = arith.constant 128 : index
    %18 = vector.load %arg2[%c0_11, %c128_12] : memref<128x384xbf16, #tpu.memory_space<vmem>>, vector<128x256xbf16>
    %cst_13 = arith.constant dense<0.000000e+00> : vector<128x256xf32>
    %19 = tpu.matmul %17, %18, %cst_13 {dimension_numbers = #tpu.dot_dimension_numbers<[1], [0], [0], [1], [0, 0, 1, 1], [], []>} : vector<128x128xbf16>, vector<128x256xbf16>, vector<128x256xf32> -> vector<128x256xf32>
    %c0_14 = arith.constant 0 : index
    %c256 = arith.constant 256 : index
    %20 = vector.load %arg4[%c0_14, %c256] : memref<1x640xf32, #tpu.memory_space<vmem>>, vector<1x256xf32>
    %21 = vector.broadcast %20 : vector<1x256xf32> to vector<128x256xf32>
    %22 = arith.addf %19, %21 : vector<128x256xf32>
    %cst_15 = arith.constant 0.000000e+00 : f32
    %23 = vector.broadcast %cst_15 : f32 to vector<128x256xf32>
    %24 = arith.maximumf %22, %23 : vector<128x256xf32>
    %25 = arith.truncf %24 : vector<128x256xf32> to vector<128x256xbf16>
    %c0_16 = arith.constant 0 : index
    %c0_17 = arith.constant 0 : index
    %26 = vector.load %arg3[%c0_16, %c0_17] : memref<256x128xbf16, #tpu.memory_space<vmem>>, vector<256x128xbf16>
    %cst_18 = arith.constant dense<0.000000e+00> : vector<128x128xf32>
    %27 = tpu.matmul %25, %26, %cst_18 {dimension_numbers = #tpu.dot_dimension_numbers<[1], [0], [0], [1], [0, 0, 1, 1], [], []>} : vector<128x256xbf16>, vector<256x128xbf16>, vector<128x128xf32> -> vector<128x128xf32>
    %c0_19 = arith.constant 0 : index
    %c512 = arith.constant 512 : index
    %28 = vector.load %arg4[%c0_19, %c512] : memref<1x640xf32, #tpu.memory_space<vmem>>, vector<1x128xf32>
    %29 = vector.broadcast %28 : vector<1x128xf32> to vector<128x128xf32>
    %30 = arith.addf %27, %29 : vector<128x128xf32>
    %31 = vector.extract_strided_slice %30 {offsets = [0, 8], sizes = [128, 1], strides = [1, 1]} : vector<128x128xf32> to vector<128x1xf32>
    %32 = vector.shape_cast %31 : vector<128x1xf32> to vector<1x128x1xf32>
    %cst_20 = arith.constant dense<0.000000e+00> : vector<1xf32>
    %33 = vector.multi_reduction <add>, %32, %cst_20 [1, 2] : vector<1x128x1xf32> to vector<1xf32>
    %34 = vector.shape_cast %33 : vector<1xf32> to vector<1x1x1xf32>
    %35 = vector.extract %34[0, 0, 0] : f32 from vector<1x1x1xf32>
    %cst_21 = arith.constant 1.280000e+02 : f32
    %36 = arith.divf %35, %cst_21 : f32
    %37 = vector.broadcast %36 : f32 to vector<128x128xf32>
    %38 = arith.subf %30, %37 : vector<128x128xf32>
    %c0_22 = arith.constant 0 : index
    %c0_23 = arith.constant 0 : index
    %39 = vector.load %arg5[%c0_22, %c0_23] : memref<128x128xf32, #tpu.memory_space<vmem>>, vector<128x128xf32>
    tpu.vector_store %arg5[%c0_22, %c0_23], %38 {strides = array<i32>} : memref<128x128xf32, #tpu.memory_space<vmem>>, vector<128x128xf32>,
    return
  }
}

</mosaic_0001>

<llo_original>
// kernel: duelling_dqn_forward.1
$region0: #{duelling_dqn_forward.1}
  #allocation0 [shape = 'u32[]', space=smem, size = 0x4, offset = 0x4, fixed_abs, tag = 'smem constant byte address 0x4 - core index']
  #allocation1 [shape = 'u32[144,128]{1,0:T(1,128)}', space=vmem, size = 0x12000, scoped, tag = 'internal scratch']
  %s0 = inlined_call_operand.vmem [shape: f32[128,32], index: 0, kind: input, shape index: {}]
  %s1 = inlined_call_operand.vmem [shape: bf16[32,128], index: 1, kind: input, shape index: {}]
  %s2 = inlined_call_operand.hbm [shape: bf16[128,384], index: 2, kind: input, shape index: {}]
  %s3 = inlined_call_operand.vmem [shape: bf16[256,128], index: 3, kind: input, shape index: {}]
  %s4 = inlined_call_operand.vmem [shape: f32[1,640], index: 4, kind: input, shape index: {}]
  %s5 = inlined_call_operand.vmem [shape: f32[128,128], index: 5, kind: output, shape index: {}]
  %s6 = sld [smem:[#allocation0]]
  $region34: #{duelling_dqn_forward.1} parent=0
    _
  %s8 = ssub.s32 1, %s6
  %s9 = scalar_select 0, %s8, %s6
  $region1: #{duelling_dqn_forward.1} parent=0
    #allocation2 [shape = 'u8[98304]{0}', space=vmem, size = 0x18000, scoped, tag = 'input window, operand 2, single buffered']
    #allocation3 [shape = 's32[1]{0}', space=sflag, size = 0x4, scoped, tag = 'scoped memory for duelling_dqn_forward.1']
    %10 = vsyncpa [#allocation3], 0
    // Predicated region
    $region2: #{duelling_dqn_forward.1} parent=1 // pred_check
      _
    $region3: #{duelling_dqn_forward.1} parent=1 // pred_check_branch
      %12 = sbr.rel (0) target = $region5
    $region4: #{duelling_dqn_forward.1} parent=1 // pred_region
      _
    $region5: #{duelling_dqn_forward.1} parent=1 // pred_fallthru
      _
    // Predicated region
    $region6: #{duelling_dqn_forward.1} parent=1 // pred_check
      _
    $region7: #{duelling_dqn_forward.1} parent=1 // pred_check_branch
      %14 = sbr.rel (0) target = $region9
    $region8: #{duelling_dqn_forward.1} parent=1 // pred_region
      _
    $region9: #{duelling_dqn_forward.1} parent=1 // pred_fallthru
      _
    // Predicated region
    $region10: #{duelling_dqn_forward.1} parent=1 // pred_check
      _
    $region11: #{duelling_dqn_forward.1} parent=1 // pred_check_branch
      %16 = sbr.rel (0) target = $region13
    $region12: #{duelling_dqn_forward.1} parent=1 // pred_region
      %s18 = ssub.s32 3072, 3072
      %19 = vsyncadd [#allocation3], %s18
      %s20 = sshll.u32 [#allocation2], 4
      %s21 = int_to_ptr.vmem [resolvable:$true] %s20
      %26 = dma.hbm_to_vmem [thread:$0]  %s2, 3072, %s21, [#allocation3], 192, 192, 12
    $region13: #{duelling_dqn_forward.1} parent=1 // pred_fallthru
      _
    // Predicated region
    $region14: #{duelling_dqn_forward.1} parent=1 // pred_check
      _
    $region15: #{duelling_dqn_forward.1} parent=1 // pred_check_branch
      %28 = sbr.rel (0) target = $region17
    $region16: #{duelling_dqn_forward.1} parent=1 // pred_region
      _
    $region17: #{duelling_dqn_forward.1} parent=1 // pred_fallthru
      _
    // Predicated region
    $region18: #{duelling_dqn_forward.1} parent=1 // pred_check
      _
    $region19: #{duelling_dqn_forward.1} parent=1 // pred_check_branch
      %30 = sbr.rel (0) target = $region21
    $region20: #{duelling_dqn_forward.1} parent=1 // pred_region
      _
    $region21: #{duelling_dqn_forward.1} parent=1 // pred_fallthru
      _
    // Predicated region
    $region22: #{duelling_dqn_forward.1} parent=1 // pred_check
      _
    $region23: #{duelling_dqn_forward.1} parent=1 // pred_check_branch
      %32 = sbr.rel (0) target = $region25
    $region24: #{duelling_dqn_forward.1} parent=1 // pred_region
      %33 = dma.done [#allocation3], 3072
    $region25: #{duelling_dqn_forward.1} parent=1 // pred_fallthru
      _
    %v35 = vld [vmem:[%s0] sm:$0xff]
    %v36 = vld [vmem:[%s0 + $0x8] sm:$0xff]
    %v37 = vld [vmem:[%s0 + $0x10] sm:$0xff]
    %v38 = vld [vmem:[%s0 + $0x18] sm:$0xff]
    %v39 = vld [vmem:[%s0 + $0x20] sm:$0xff]
    %v40 = vld [vmem:[%s0 + $0x28] sm:$0xff]
    %v41 = vld [vmem:[%s0 + $0x30] sm:$0xff]
    %v42 = vld [vmem:[%s0 + $0x38] sm:$0xff]
    %v43 = vld [vmem:[%s0 + $0x40] sm:$0xff]
    %v44 = vld [vmem:[%s0 + $0x48] sm:$0xff]
    %v45 = vld [vmem:[%s0 + $0x50] sm:$0xff]
    %v46 = vld [vmem:[%s0 + $0x58] sm:$0xff]
    %v47 = vld [vmem:[%s0 + $0x60] sm:$0xff]
    %v48 = vld [vmem:[%s0 + $0x68] sm:$0xff]
    %v49 = vld [vmem:[%s0 + $0x70] sm:$0xff]
    %v50 = vld [vmem:[%s0 + $0x78] sm:$0xff]
    %v51 = vpack.c.bf16 %v36, %v35
    %v52 = vpack.c.bf16 %v38, %v37
    %v53 = vpack.c.bf16 %v40, %v39
    %v54 = vpack.c.bf16 %v42, %v41
    %v55 = vpack.c.bf16 %v44, %v43
    %v56 = vpack.c.bf16 %v46, %v45
    %v57 = vpack.c.bf16 %v48, %v47
    %v58 = vpack.c.bf16 %v50, %v49
    %v59 = vld [vmem:[%s1] sm:$0xf]
    %v60 = vld [vmem:[%s1 + $0x4] sm:$0xf]
    %v61 = vld [vmem:[%s1 + $0x8] sm:$0xf]
    %v62 = vld [vmem:[%s1 + $0xc] sm:$0xf]
    %v63 = vld [vmem:[%s4] sm:$0x1]
    %v65 = vlaneseq
    %v66 = vshrl.u32 %v65, 7
    %v67 = vsub.s32 0, %v66
    %v68 = vrot.slane %v63, %v67
    %v74 = vunpack.c.l.b16 %v59
    %v75 = vunpack.c.l.b16 %v60
    %v76 = vunpack.c.l.b16 %v61
    %v77 = vunpack.c.l.b16 %v62
    %v78 = vpack.c.b16 %v75, %v74
    %v79 = vpack.c.b16 %v77, %v76
    %vm82 = vcmask 261120
    %v84 = vsel %vm82, %v51, 0
    %v87 = vsel %vm82, %v52, 0
    %v90 = vsel %vm82, %v53, 0
    %v93 = vsel %vm82, %v54, 0
    %v96 = vsel %vm82, %v55, 0
    %v99 = vsel %vm82, %v56, 0
    %v102 = vsel %vm82, %v57, 0
    %v105 = vsel %vm82, %v58, 0
    %107 = vmatprep.subr.bf16.mxu0 0
    %108 = vmatpush1.bf16.msra.mxu0 %v78
    %109 = vmatprep.subr.bf16.mxu0 0
    %110 = vmatpush1.bf16.msra.mxu0 %v79
    %111 = vmatprep.subr.bf16.mxu0 0
    %112 = vmatpush1.bf16.msra.mxu0 0
    %113 = vmatprep.subr.bf16.mxu0 0
    %114 = vmatpush1.bf16.msra.mxu0 0
    %115 = vmatprep.subr.bf16.mxu0 0
    %116 = vmatpush1.bf16.msra.mxu0 0
    %117 = vmatprep.subr.bf16.mxu0 0
    %118 = vmatpush1.bf16.msra.mxu0 0
    %119 = vmatprep.subr.bf16.mxu0 0
    %120 = vmatpush1.bf16.msra.mxu0 0
    %121 = vmatprep.subr.bf16.mxu0 0
    %122 = vmatpush1.bf16.msra.mxu0 0
    %123 = vmatprep.subr.bf16.mxu0 0
    %124 = vmatpush1.bf16.msra.mxu0 0
    %125 = vmatprep.subr.bf16.mxu0 0
    %126 = vmatpush1.bf16.msra.mxu0 0
    %127 = vmatprep.subr.bf16.mxu0 0
    %128 = vmatpush1.bf16.msra.mxu0 0
    %129 = vmatprep.subr.bf16.mxu0 0
    %130 = vmatpush1.bf16.msra.mxu0 0
    %131 = vmatprep.subr.bf16.mxu0 0
    %132 = vmatpush1.bf16.msra.mxu0 0
    %133 = vmatprep.subr.bf16.mxu0 0
    %134 = vmatpush1.bf16.msra.mxu0 0
    %135 = vmatprep.subr.bf16.mxu0 0
    %136 = vmatpush1.bf16.msra.mxu0 0
    %137 = vmatprep.subr.bf16.mxu0 0
    %138 = vmatpush1.bf16.msra.mxu0 0
    %139 = vmatprep.mubr.bf16.mxu0 0
    %140 = vmatmul.mubr.bf16.gmra.mrb[0].mxu0 %v84
    %v141 = vpop.f32.mrb[0].mxu0
    %v142 = vadd.f32 %v68, %v141
    %v143 = vpop.f32.mrb[0].mxu0
    %v144 = vpop.f32.mrb[0].mxu0
    %v145 = vadd.f32 %v68, %v144
    %v146 = vpop.f32.mrb[0].mxu0
    %147 = vmatprep.mubr.bf16.mxu0 0
    %148 = vmatmul.mubr.bf16.gmra.mrb[0].mxu0 %v87
    %v149 = vpop.f32.mrb[0].mxu0
    %v150 = vadd.f32 %v68, %v149
    %v151 = vpop.f32.mrb[0].mxu0
    %v152 = vpop.f32.mrb[0].mxu0
    %v153 = vadd.f32 %v68, %v152
    %v154 = vpop.f32.mrb[0].mxu0
    %155 = vmatprep.mubr.bf16.mxu0 0
    %156 = vmatmul.mubr.bf16.gmra.mrb[0].mxu0 %v90
    %v157 = vpop.f32.mrb[0].mxu0
    %v158 = vadd.f32 %v68, %v157
    %v159 = vpop.f32.mrb[0].mxu0
    %v160 = vpop.f32.mrb[0].mxu0
    %v161 = vadd.f32 %v68, %v160
    %v162 = vpop.f32.mrb[0].mxu0
    %163 = vmatprep.mubr.bf16.mxu0 0
    %164 = vmatmul.mubr.bf16.gmra.mrb[0].mxu0 %v93
    %v165 = vpop.f32.mrb[0].mxu0
    %v166 = vadd.f32 %v68, %v165
    %v167 = vpop.f32.mrb[0].mxu0
    %v168 = vpop.f32.mrb[0].mxu0
    %v169 = vadd.f32 %v68, %v168
    %v170 = vpop.f32.mrb[0].mxu0
    %171 = vmatprep.mubr.bf16.mxu0 0
    %172 = vmatmul.mubr.bf16.gmra.mrb[0].mxu0 %v96
    %v173 = vpop.f32.mrb[0].mxu0
    %v174 = vadd.f32 %v68, %v173
    %v175 = vpop.f32.mrb[0].mxu0
    %v176 = vpop.f32.mrb[0].mxu0
    %v177 = vadd.f32 %v68, %v176
    %v178 = vpop.f32.mrb[0].mxu0
    %179 = vmatprep.mubr.bf16.mxu0 0
    %180 = vmatmul.mubr.bf16.gmra.mrb[0].mxu0 %v99
    %v181 = vpop.f32.mrb[0].mxu0
    %v182 = vadd.f32 %v68, %v181
    %v183 = vpop.f32.mrb[0].mxu0
    %v184 = vpop.f32.mrb[0].mxu0
    %v185 = vadd.f32 %v68, %v184
    %v186 = vpop.f32.mrb[0].mxu0
    %187 = vmatprep.mubr.bf16.mxu0 0
    %188 = vmatmul.mubr.bf16.gmra.mrb[0].mxu0 %v102
    %v189 = vpop.f32.mrb[0].mxu0
    %v190 = vadd.f32 %v68, %v189
    %v191 = vpop.f32.mrb[0].mxu0
    %v192 = vpop.f32.mrb[0].mxu0
    %v193 = vadd.f32 %v68, %v192
    %v194 = vpop.f32.mrb[0].mxu0
    %195 = vmatprep.mubr.bf16.mxu0 0
    %196 = vmatmul.mubr.bf16.gmra.mrb[0].mxu0 %v105
    %v197 = vpop.f32.mrb[0].mxu0
    %v198 = vadd.f32 %v68, %v197
    %v199 = vpop.f32.mrb[0].mxu0
    %v200 = vpop.f32.mrb[0].mxu0
    %v201 = vadd.f32 %v68, %v200
    %v202 = vpop.f32.mrb[0].mxu0
    %203 = vdwg.mxu0
    %v204 = vmax.f32 %v142, 0.0
    %v205 = vmax.f32 %v145, 0.0
    %v206 = vmax.f32 %v150, 0.0
    %v207 = vmax.f32 %v153, 0.0
    %v208 = vmax.f32 %v158, 0.0
    %v209 = vmax.f32 %v161, 0.0
    %v210 = vmax.f32 %v166, 0.0
    %v211 = vmax.f32 %v169, 0.0
    %v212 = vmax.f32 %v174, 0.0
    %v213 = vmax.f32 %v177, 0.0
    %v214 = vmax.f32 %v182, 0.0
    %v215 = vmax.f32 %v185, 0.0
    %v216 = vmax.f32 %v190, 0.0
    %v217 = vmax.f32 %v193, 0.0
    %v218 = vmax.f32 %v198, 0.0
    %v219 = vmax.f32 %v201, 0.0
    %v220 = vpack.c.bf16 %v205, %v204
    %v221 = vpack.c.bf16 %v207, %v206
    %v222 = vpack.c.bf16 %v209, %v208
    %v223 = vpack.c.bf16 %v211, %v210
    %v224 = vpack.c.bf16 %v213, %v212
    %v225 = vpack.c.bf16 %v215, %v214
    %v226 = vpack.c.bf16 %v217, %v216
    %v227 = vpack.c.bf16 %v219, %v218
    %v228 = vld [vmem:[#allocation2] sm:$0xf]
    %v229 = vld [vmem:[#allocation2 + $0xc] sm:$0xf]
    %v230 = vld [vmem:[#allocation2 + $0x18] sm:$0xf]
    %v231 = vld [vmem:[#allocation2 + $0x24] sm:$0xf]
    %v232 = vld [vmem:[#allocation2 + $0x30] sm:$0xf]
    %v233 = vld [vmem:[#allocation2 + $0x3c] sm:$0xf]
    %v234 = vld [vmem:[#allocation2 + $0x48] sm:$0xf]
    %v235 = vld [vmem:[#allocation2 + $0x54] sm:$0xf]
    %v236 = vld [vmem:[#allocation2 + $0x60] sm:$0xf]
    %v237 = vld [vmem:[#allocation2 + $0x6c] sm:$0xf]
    %v238 = vld [vmem:[#allocation2 + $0x78] sm:$0xf]
    %v239 = vld [vmem:[#allocation2 + $0x84] sm:$0xf]
    %v240 = vld [vmem:[#allocation2 + $0x90] sm:$0xf]
    %v241 = vld [vmem:[#allocation2 + $0x9c] sm:$0xf]
    %v242 = vld [vmem:[#allocation2 + $0xa8] sm:$0xf]
    %v243 = vld [vmem:[#allocation2 + $0xb4] sm:$0xf]
    %v244 = vld [vmem:[%s4 + $0x1] sm:$0x1]
    %v246 = vlaneseq
    %v247 = vshrl.u32 %v246, 7
    %v248 = vsub.s32 0, %v247
    %v249 = vrot.slane %v244, %v248
    %v267 = vunpack.c.l.b16 %v228
    %v268 = vunpack.c.l.b16 %v229
    %v269 = vunpack.c.l.b16 %v230
    %v270 = vunpack.c.l.b16 %v231
    %v271 = vunpack.c.l.b16 %v232
    %v272 = vunpack.c.l.b16 %v233
    %v273 = vunpack.c.l.b16 %v234
    %v274 = vunpack.c.l.b16 %v235
    %v275 = vunpack.c.l.b16 %v236
    %v276 = vunpack.c.l.b16 %v237
    %v277 = vunpack.c.l.b16 %v238
    %v278 = vunpack.c.l.b16 %v239
    %v279 = vunpack.c.l.b16 %v240
    %v280 = vunpack.c.l.b16 %v241
    %v281 = vunpack.c.l.b16 %v242
    %v282 = vunpack.c.l.b16 %v243
    %v283 = vpack.c.b16 %v268, %v267
    %v284 = vpack.c.b16 %v270, %v269
    %v285 = vpack.c.b16 %v272, %v271
    %v286 = vpack.c.b16 %v274, %v273
    %v287 = vpack.c.b16 %v276, %v275
    %v288 = vpack.c.b16 %v278, %v277
    %v289 = vpack.c.b16 %v280, %v279
    %v290 = vpack.c.b16 %v282, %v281
    %299 = vmatprep.subr.bf16.mxu0 0
    %300 = vmatpush1.bf16.msra.mxu0 %v283
    %301 = vmatprep.subr.bf16.mxu0 0
    %302 = vmatpush1.bf16.msra.mxu0 %v284
    %303 = vmatprep.subr.bf16.mxu0 0
    %304 = vmatpush1.bf16.msra.mxu0 %v285
    %305 = vmatprep.subr.bf16.mxu0 0
    %306 = vmatpush1.bf16.msra.mxu0 %v286
    %307 = vmatprep.subr.bf16.mxu0 0
    %308 = vmatpush1.bf16.msra.mxu0 %v287
    %309 = vmatprep.subr.bf16.mxu0 0
    %310 = vmatpush1.bf16.msra.mxu0 %v288
    %311 = vmatprep.subr.bf16.mxu0 0
    %312 = vmatpush1.bf16.msra.mxu0 %v289
    %313 = vmatprep.subr.bf16.mxu0 0
    %314 = vmatpush1.bf16.msra.mxu0 %v290
    %315 = vmatprep.subr.bf16.mxu0 0
    %316 = vmatpush1.bf16.msra.mxu0 0
    %317 = vmatprep.subr.bf16.mxu0 0
    %318 = vmatpush1.bf16.msra.mxu0 0
    %319 = vmatprep.subr.bf16.mxu0 0
    %320 = vmatpush1.bf16.msra.mxu0 0
    %321 = vmatprep.subr.bf16.mxu0 0
    %322 = vmatpush1.bf16.msra.mxu0 0
    %323 = vmatprep.subr.bf16.mxu0 0
    %324 = vmatpush1.bf16.msra.mxu0 0
    %325 = vmatprep.subr.bf16.mxu0 0
    %326 = vmatpush1.bf16.msra.mxu0 0
    %327 = vmatprep.subr.bf16.mxu0 0
    %328 = vmatpush1.bf16.msra.mxu0 0
    %329 = vmatprep.subr.bf16.mxu0 0
    %330 = vmatpush1.bf16.msra.mxu0 0
    %331 = vmatprep.mubr.bf16.mxu0 0
    %332 = vmatmul.mubr.bf16.gmra.mrb[0].mxu0 %v220
    %v333 = vpop.f32.mrb[0].mxu0
    %v334 = vadd.f32 %v249, %v333
    %v335 = vpop.f32.mrb[0].mxu0
    %v336 = vpop.f32.mrb[0].mxu0
    %v337 = vadd.f32 %v249, %v336
    %v338 = vpop.f32.mrb[0].mxu0
    %339 = vmatprep.mubr.bf16.mxu0 0
    %340 = vmatmul.mubr.bf16.gmra.mrb[0].mxu0 %v221
    %v341 = vpop.f32.mrb[0].mxu0
    %v342 = vadd.f32 %v249, %v341
    %v343 = vpop.f32.mrb[0].mxu0
    %v344 = vpop.f32.mrb[0].mxu0
    %v345 = vadd.f32 %v249, %v344
    %v346 = vpop.f32.mrb[0].mxu0
    %347 = vmatprep.mubr.bf16.mxu0 0
    %348 = vmatmul.mubr.bf16.gmra.mrb[0].mxu0 %v222
    %v349 = vpop.f32.mrb[0].mxu0
    %v350 = vadd.f32 %v249, %v349
    %v351 = vpop.f32.mrb[0].mxu0
    %v352 = vpop.f32.mrb[0].mxu0
    %v353 = vadd.f32 %v249, %v352
    %v354 = vpop.f32.mrb[0].mxu0
    %355 = vmatprep.mubr.bf16.mxu0 0
    %356 = vmatmul.mubr.bf16.gmra.mrb[0].mxu0 %v223
    %v357 = vpop.f32.mrb[0].mxu0
    %v358 = vadd.f32 %v249, %v357
    %v359 = vpop.f32.mrb[0].mxu0
    %v360 = vpop.f32.mrb[0].mxu0
    %v361 = vadd.f32 %v249, %v360
    %v362 = vpop.f32.mrb[0].mxu0
    %363 = vmatprep.mubr.bf16.mxu0 0
    %364 = vmatmul.mubr.bf16.gmra.mrb[0].mxu0 %v224
    %v365 = vpop.f32.mrb[0].mxu0
    %v366 = vadd.f32 %v249, %v365
    %v367 = vpop.f32.mrb[0].mxu0
    %v368 = vpop.f32.mrb[0].mxu0
    %v369 = vadd.f32 %v249, %v368
    %v370 = vpop.f32.mrb[0].mxu0
    %371 = vmatprep.mubr.bf16.mxu0 0
    %372 = vmatmul.mubr.bf16.gmra.mrb[0].mxu0 %v225
    %v373 = vpop.f32.mrb[0].mxu0
    %v374 = vadd.f32 %v249, %v373
    %v375 = vpop.f32.mrb[0].mxu0
    %v376 = vpop.f32.mrb[0].mxu0
    %v377 = vadd.f32 %v249, %v376
    %v378 = vpop.f32.mrb[0].mxu0
    %379 = vmatprep.mubr.bf16.mxu0 0
    %380 = vmatmul.mubr.bf16.gmra.mrb[0].mxu0 %v226
    %v381 = vpop.f32.mrb[0].mxu0
    %v382 = vadd.f32 %v249, %v381
    %v383 = vpop.f32.mrb[0].mxu0
    %v384 = vpop.f32.mrb[0].mxu0
    %v385 = vadd.f32 %v249, %v384
    %v386 = vpop.f32.mrb[0].mxu0
    %387 = vmatprep.mubr.bf16.mxu0 0
    %388 = vmatmul.mubr.bf16.gmra.mrb[0].mxu0 %v227
    %v389 = vpop.f32.mrb[0].mxu0
    %v390 = vadd.f32 %v249, %v389
    %v391 = vpop.f32.mrb[0].mxu0
    %v392 = vpop.f32.mrb[0].mxu0
    %v393 = vadd.f32 %v249, %v392
    %v394 = vpop.f32.mrb[0].mxu0
    %395 = vdwg.mxu0
    %v396 = vmax.f32 %v334, 0.0
    %v397 = vmax.f32 %v337, 0.0
    %v398 = vmax.f32 %v342, 0.0
    %v399 = vmax.f32 %v345, 0.0
    %v400 = vmax.f32 %v350, 0.0
    %v401 = vmax.f32 %v353, 0.0
    %v402 = vmax.f32 %v358, 0.0
    %v403 = vmax.f32 %v361, 0.0
    %v404 = vmax.f32 %v366, 0.0
    %v405 = vmax.f32 %v369, 0.0
    %v406 = vmax.f32 %v374, 0.0
    %v407 = vmax.f32 %v377, 0.0
    %v408 = vmax.f32 %v382, 0.0
    %v409 = vmax.f32 %v385, 0.0
    %v410 = vmax.f32 %v390, 0.0
    %v411 = vmax.f32 %v393, 0.0
    %v412 = vpack.c.bf16 %v397, %v396
    %v413 = vpack.c.bf16 %v399, %v398
    %v414 = vpack.c.bf16 %v401, %v400
    %v415 = vpack.c.bf16 %v403, %v402
    %v416 = vpack.c.bf16 %v405, %v404
    %v417 = vpack.c.bf16 %v407, %v406
    %v418 = vpack.c.bf16 %v409, %v408
    %v419 = vpack.c.bf16 %v411, %v410
    %v420 = vld [vmem:[#allocation2 + $0x4] sm:$0xff]
    %v421 = vld [vmem:[#allocation2 + $0x10] sm:$0xff]
    %v422 = vld [vmem:[#allocation2 + $0x1c] sm:$0xff]
    %v423 = vld [vmem:[#allocation2 + $0x28] sm:$0xff]
    %v424 = vld [vmem:[#allocation2 + $0x34] sm:$0xff]
    %v425 = vld [vmem:[#allocation2 + $0x40] sm:$0xff]
    %v426 = vld [vmem:[#allocation2 + $0x4c] sm:$0xff]
    %v427 = vld [vmem:[#allocation2 + $0x58] sm:$0xff]
    %v428 = vld [vmem:[#allocation2 + $0x64] sm:$0xff]
    %v429 = vld [vmem:[#allocation2 + $0x70] sm:$0xff]
    %v430 = vld [vmem:[#allocation2 + $0x7c] sm:$0xff]
    %v431 = vld [vmem:[#allocation2 + $0x88] sm:$0xff]
    %v432 = vld [vmem:[#allocation2 + $0x94] sm:$0xff]
    %v433 = vld [vmem:[#allocation2 + $0xa0] sm:$0xff]
    %v434 = vld [vmem:[#allocation2 + $0xac] sm:$0xff]
    %v435 = vld [vmem:[#allocation2 + $0xb8] sm:$0xff]
    %v436 = vld [vmem:[%s4 + $0x2] sm:$0x3]
    %v438 = vlaneseq
    %v439 = vshrl.u32 %v438, 7
    %v440 = vsub.s32 0, %v439
    %v441 = vrot.slane %v436, %v440
    %v442 = vlaneseq
    %v443 = vshrl.u32 %v442, 7
    %v444 = vsub.s32 1, %v443
    %v445 = vrot.slane %v436, %v444
    %v464 = vunpack.c.l.b16 %v420
    %v465 = vunpack.c.h.b16 %v420
    %v466 = vunpack.c.l.b16 %v421
    %v467 = vunpack.c.h.b16 %v421
    %v468 = vunpack.c.l.b16 %v422
    %v469 = vunpack.c.h.b16 %v422
    %v470 = vunpack.c.l.b16 %v423
    %v471 = vunpack.c.h.b16 %v423
    %v472 = vunpack.c.l.b16 %v424
    %v473 = vunpack.c.h.b16 %v424
    %v474 = vunpack.c.l.b16 %v425
    %v475 = vunpack.c.h.b16 %v425
    %v476 = vunpack.c.l.b16 %v426
    %v477 = vunpack.c.h.b16 %v426
    %v478 = vunpack.c.l.b16 %v427
    %v479 = vunpack.c.h.b16 %v427
    %v480 = vunpack.c.l.b16 %v428
    %v481 = vunpack.c.h.b16 %v428
    %v482 = vunpack.c.l.b16 %v429
    %v483 = vunpack.c.h.b16 %v429
    %v484 = vunpack.c.l.b16 %v430
    %v485 = vunpack.c.h.b16 %v430
    %v486 = vunpack.c.l.b16 %v431
    %v487 = vunpack.c.h.b16 %v431
    %v488 = vunpack.c.l.b16 %v432
    %v489 = vunpack.c.h.b16 %v432
    %v490 = vunpack.c.l.b16 %v433
    %v491 = vunpack.c.h.b16 %v433
    %v492 = vunpack.c.l.b16 %v434
    %v493 = vunpack.c.h.b16 %v434
    %v494 = vunpack.c.l.b16 %v435
    %v495 = vunpack.c.h.b16 %v435
    %v496 = vpack.c.b16 %v466, %v464
    %v497 = vpack.c.b16 %v467, %v465
    %v498 = vpack.c.b16 %v470, %v468
    %v499 = vpack.c.b16 %v471, %v469
    %v500 = vpack.c.b16 %v474, %v472
    %v501 = vpack.c.b16 %v475, %v473
    %v502 = vpack.c.b16 %v478, %v476
    %v503 = vpack.c.b16 %v479, %v477
    %v504 = vpack.c.b16 %v482, %v480
    %v505 = vpack.c.b16 %v483, %v481
    %v506 = vpack.c.b16 %v486, %v484
    %v507 = vpack.c.b16 %v487, %v485
    %v508 = vpack.c.b16 %v490, %v488
    %v509 = vpack.c.b16 %v491, %v489
    %v510 = vpack.c.b16 %v494, %v492
    %v511 = vpack.c.b16 %v495, %v493
    %528 = vmatprep.subr.bf16.mxu0 %v497
    %529 = vmatpush1.bf16.msra.mxu0 %v496
    %530 = vmatprep.subr.bf16.mxu0 %v499
    %531 = vmatpush1.bf16.msra.mxu0 %v498
    %532 = vmatprep.subr.bf16.mxu0 %v501
    %533 = vmatpush1.bf16.msra.mxu0 %v500
    %534 = vmatprep.subr.bf16.mxu0 %v503
    %535 = vmatpush1.bf16.msra.mxu0 %v502
    %536 = vmatprep.subr.bf16.mxu0 %v505
    %537 = vmatpush1.bf16.msra.mxu0 %v504
    %538 = vmatprep.subr.bf16.mxu0 %v507
    %539 = vmatpush1.bf16.msra.mxu0 %v506
    %540 = vmatprep.subr.bf16.mxu0 %v509
    %541 = vmatpush1.bf16.msra.mxu0 %v508
    %542 = vmatprep.subr.bf16.mxu0 %v511
    %543 = vmatpush1.bf16.msra.mxu0 %v510
    %544 = vmatprep.subr.bf16.mxu0 0
    %545 = vmatpush1.bf16.msra.mxu0 0
    %546 = vmatprep.subr.bf16.mxu0 0
    %547 = vmatpush1.bf16.msra.mxu0 0
    %548 = vmatprep.subr.bf16.mxu0 0
    %549 = vmatpush1.bf16.msra.mxu0 0
    %550 = vmatprep.subr.bf16.mxu0 0
    %551 = vmatpush1.bf16.msra.mxu0 0
    %552 = vmatprep.subr.bf16.mxu0 0
    %553 = vmatpush1.bf16.msra.mxu0 0
    %554 = vmatprep.subr.bf16.mxu0 0
    %555 = vmatpush1.bf16.msra.mxu0 0
    %556 = vmatprep.subr.bf16.mxu0 0
    %557 = vmatpush1.bf16.msra.mxu0 0
    %558 = vmatprep.subr.bf16.mxu0 0
    %559 = vmatpush1.bf16.msra.mxu0 0
    %560 = vmatprep.mubr.bf16.mxu0 0
    %561 = vmatmul.mubr.bf16.gmra.mrb[0].mxu0 %v412
    %v562 = vpop.f32.mrb[0].mxu0
    %v563 = vadd.f32 %v441, %v562
    %v564 = vpop.f32.mrb[0].mxu0
    %v565 = vadd.f32 %v445, %v564
    %v566 = vpop.f32.mrb[0].mxu0
    %v567 = vadd.f32 %v441, %v566
    %v568 = vpop.f32.mrb[0].mxu0
    %v569 = vadd.f32 %v445, %v568
    %570 = vmatprep.mubr.bf16.mxu0 0
    %571 = vmatmul.mubr.bf16.gmra.mrb[0].mxu0 %v413
    %v572 = vpop.f32.mrb[0].mxu0
    %v573 = vadd.f32 %v441, %v572
    %v574 = vpop.f32.mrb[0].mxu0
    %v575 = vadd.f32 %v445, %v574
    %v576 = vpop.f32.mrb[0].mxu0
    %v577 = vadd.f32 %v441, %v576
    %v578 = vpop.f32.mrb[0].mxu0
    %v579 = vadd.f32 %v445, %v578
    %580 = vmatprep.mubr.bf16.mxu0 0
    %581 = vmatmul.mubr.bf16.gmra.mrb[0].mxu0 %v414
    %v582 = vpop.f32.mrb[0].mxu0
    %v583 = vadd.f32 %v441, %v582
    %v584 = vpop.f32.mrb[0].mxu0
    %v585 = vadd.f32 %v445, %v584
    %v586 = vpop.f32.mrb[0].mxu0
    %v587 = vadd.f32 %v441, %v586
    %v588 = vpop.f32.mrb[0].mxu0
    %v589 = vadd.f32 %v445, %v588
    %590 = vmatprep.mubr.bf16.mxu0 0
    %591 = vmatmul.mubr.bf16.gmra.mrb[0].mxu0 %v415
    %v592 = vpop.f32.mrb[0].mxu0
    %v593 = vadd.f32 %v441, %v592
    %v594 = vpop.f32.mrb[0].mxu0
    %v595 = vadd.f32 %v445, %v594
    %v596 = vpop.f32.mrb[0].mxu0
    %v597 = vadd.f32 %v441, %v596
    %v598 = vpop.f32.mrb[0].mxu0
    %v599 = vadd.f32 %v445, %v598
    %600 = vmatprep.mubr.bf16.mxu0 0
    %601 = vmatmul.mubr.bf16.gmra.mrb[0].mxu0 %v416
    %v602 = vpop.f32.mrb[0].mxu0
    %v603 = vadd.f32 %v441, %v602
    %v604 = vpop.f32.mrb[0].mxu0
    %v605 = vadd.f32 %v445, %v604
    %v606 = vpop.f32.mrb[0].mxu0
    %v607 = vadd.f32 %v441, %v606
    %v608 = vpop.f32.mrb[0].mxu0
    %v609 = vadd.f32 %v445, %v608
    %610 = vmatprep.mubr.bf16.mxu0 0
    %611 = vmatmul.mubr.bf16.gmra.mrb[0].mxu0 %v417
    %v612 = vpop.f32.mrb[0].mxu0
    %v613 = vadd.f32 %v441, %v612
    %v614 = vpop.f32.mrb[0].mxu0
    %v615 = vadd.f32 %v445, %v614
    %v616 = vpop.f32.mrb[0].mxu0
    %v617 = vadd.f32 %v441, %v616
    %v618 = vpop.f32.mrb[0].mxu0
    %v619 = vadd.f32 %v445, %v618
    %620 = vmatprep.mubr.bf16.mxu0 0
    %621 = vmatmul.mubr.bf16.gmra.mrb[0].mxu0 %v418
    %v622 = vpop.f32.mrb[0].mxu0
    %v623 = vadd.f32 %v441, %v622
    %v624 = vpop.f32.mrb[0].mxu0
    %v625 = vadd.f32 %v445, %v624
    %v626 = vpop.f32.mrb[0].mxu0
    %v627 = vadd.f32 %v441, %v626
    %v628 = vpop.f32.mrb[0].mxu0
    %v629 = vadd.f32 %v445, %v628
    %630 = vmatprep.mubr.bf16.mxu0 0
    %631 = vmatmul.mubr.bf16.gmra.mrb[0].mxu0 %v419
    %v632 = vpop.f32.mrb[0].mxu0
    %v633 = vadd.f32 %v441, %v632
    %v634 = vpop.f32.mrb[0].mxu0
    %v635 = vadd.f32 %v445, %v634
    %v636 = vpop.f32.mrb[0].mxu0
    %v637 = vadd.f32 %v441, %v636
    %v638 = vpop.f32.mrb[0].mxu0
    %v639 = vadd.f32 %v445, %v638
    %640 = vdwg.mxu0
    %v641 = vmax.f32 %v563, 0.0
    %v642 = vmax.f32 %v565, 0.0
    %v643 = vmax.f32 %v567, 0.0
    %v644 = vmax.f32 %v569, 0.0
    %v645 = vmax.f32 %v573, 0.0
    %v646 = vmax.f32 %v575, 0.0
    %v647 = vmax.f32 %v577, 0.0
    %v648 = vmax.f32 %v579, 0.0
    %v649 = vmax.f32 %v583, 0.0
    %v650 = vmax.f32 %v585, 0.0
    %v651 = vmax.f32 %v587, 0.0
    %v652 = vmax.f32 %v589, 0.0
    %v653 = vmax.f32 %v593, 0.0
    %v654 = vmax.f32 %v595, 0.0
    %v655 = vmax.f32 %v597, 0.0
    %v656 = vmax.f32 %v599, 0.0
    %v657 = vmax.f32 %v603, 0.0
    %v658 = vmax.f32 %v605, 0.0
    %v659 = vmax.f32 %v607, 0.0
    %v660 = vmax.f32 %v609, 0.0
    %v661 = vmax.f32 %v613, 0.0
    %v662 = vmax.f32 %v615, 0.0
    %v663 = vmax.f32 %v617, 0.0
    %v664 = vmax.f32 %v619, 0.0
    %v665 = vmax.f32 %v623, 0.0
    %v666 = vmax.f32 %v625, 0.0
    %v667 = vmax.f32 %v627, 0.0
    %v668 = vmax.f32 %v629, 0.0
    %v669 = vmax.f32 %v633, 0.0
    %v670 = vmax.f32 %v635, 0.0
    %v671 = vmax.f32 %v637, 0.0
    %v672 = vmax.f32 %v639, 0.0
    %v673 = vpack.c.bf16 %v643, %v641
    %v674 = vpack.c.bf16 %v644, %v642
    %v675 = vpack.c.bf16 %v647, %v645
    %v676 = vpack.c.bf16 %v648, %v646
    %v677 = vpack.c.bf16 %v651, %v649
    %v678 = vpack.c.bf16 %v652, %v650
    %v679 = vpack.c.bf16 %v655, %v653
    %v680 = vpack.c.bf16 %v656, %v654
    %v681 = vpack.c.bf16 %v659, %v657
    %v682 = vpack.c.bf16 %v660, %v658
    %v683 = vpack.c.bf16 %v663, %v661
    %v684 = vpack.c.bf16 %v664, %v662
    %v685 = vpack.c.bf16 %v667, %v665
    %v686 = vpack.c.bf16 %v668, %v666
    %v687 = vpack.c.bf16 %v671, %v669
    %v688 = vpack.c.bf16 %v672, %v670
    %v689 = vld [vmem:[%s3] sm:$0xf]
    %v690 = vld [vmem:[%s3 + $0x4] sm:$0xf]
    %v691 = vld [vmem:[%s3 + $0x8] sm:$0xf]
    %v692 = vld [vmem:[%s3 + $0xc] sm:$0xf]
    %v693 = vld [vmem:[%s3 + $0x10] sm:$0xf]
    %v694 = vld [vmem:[%s3 + $0x14] sm:$0xf]
    %v695 = vld [vmem:[%s3 + $0x18] sm:$0xf]
    %v696 = vld [vmem:[%s3 + $0x1c] sm:$0xf]
    %v697 = vld [vmem:[%s3 + $0x20] sm:$0xf]
    %v698 = vld [vmem:[%s3 + $0x24] sm:$0xf]
    %v699 = vld [vmem:[%s3 + $0x28] sm:$0xf]
    %v700 = vld [vmem:[%s3 + $0x2c] sm:$0xf]
    %v701 = vld [vmem:[%s3 + $0x30] sm:$0xf]
    %v702 = vld [vmem:[%s3 + $0x34] sm:$0xf]
    %v703 = vld [vmem:[%s3 + $0x38] sm:$0xf]
    %v704 = vld [vmem:[%s3 + $0x3c] sm:$0xf]
    %v705 = vld [vmem:[%s3 + $0x40] sm:$0xf]
    %v706 = vld [vmem:[%s3 + $0x44] sm:$0xf]
    %v707 = vld [vmem:[%s3 + $0x48] sm:$0xf]
    %v708 = vld [vmem:[%s3 + $0x4c] sm:$0xf]
    %v709 = vld [vmem:[%s3 + $0x50] sm:$0xf]
    %v710 = vld [vmem:[%s3 + $0x54] sm:$0xf]
    %v711 = vld [vmem:[%s3 + $0x58] sm:$0xf]
    %v712 = vld [vmem:[%s3 + $0x5c] sm:$0xf]
    %v713 = vld [vmem:[%s3 + $0x60] sm:$0xf]
    %v714 = vld [vmem:[%s3 + $0x64] sm:$0xf]
    %v715 = vld [vmem:[%s3 + $0x68] sm:$0xf]
    %v716 = vld [vmem:[%s3 + $0x6c] sm:$0xf]
    %v717 = vld [vmem:[%s3 + $0x70] sm:$0xf]
    %v718 = vld [vmem:[%s3 + $0x74] sm:$0xf]
    %v719 = vld [vmem:[%s3 + $0x78] sm:$0xf]
    %v720 = vld [vmem:[%s3 + $0x7c] sm:$0xf]
    %v721 = vld [vmem:[%s4 + $0x4] sm:$0x1]
    %v723 = vlaneseq
    %v724 = vshrl.u32 %v723, 7
    %v725 = vsub.s32 0, %v724
    %v726 = vrot.slane %v721, %v725
    %v760 = vunpack.c.l.b16 %v689
    %v761 = vunpack.c.l.b16 %v690
    %v762 = vunpack.c.l.b16 %v691
    %v763 = vunpack.c.l.b16 %v692
    %v764 = vunpack.c.l.b16 %v693
    %v765 = vunpack.c.l.b16 %v694
    %v766 = vunpack.c.l.b16 %v695
    %v767 = vunpack.c.l.b16 %v696
    %v768 = vunpack.c.l.b16 %v697
    %v769 = vunpack.c.l.b16 %v698
    %v770 = vunpack.c.l.b16 %v699
    %v771 = vunpack.c.l.b16 %v700
    %v772 = vunpack.c.l.b16 %v701
    %v773 = vunpack.c.l.b16 %v702
    %v774 = vunpack.c.l.b16 %v703
    %v775 = vunpack.c.l.b16 %v704
    %v776 = vunpack.c.l.b16 %v705
    %v777 = vunpack.c.l.b16 %v706
    %v778 = vunpack.c.l.b16 %v707
    %v779 = vunpack.c.l.b16 %v708
    %v780 = vunpack.c.l.b16 %v709
    %v781 = vunpack.c.l.b16 %v710
    %v782 = vunpack.c.l.b16 %v711
    %v783 = vunpack.c.l.b16 %v712
    %v784 = vunpack.c.l.b16 %v713
    %v785 = vunpack.c.l.b16 %v714
    %v786 = vunpack.c.l.b16 %v715
    %v787 = vunpack.c.l.b16 %v716
    %v788 = vunpack.c.l.b16 %v717
    %v789 = vunpack.c.l.b16 %v718
    %v790 = vunpack.c.l.b16 %v719
    %v791 = vunpack.c.l.b16 %v720
    %v792 = vpack.c.b16 %v761, %v760
    %v793 = vpack.c.b16 %v763, %v762
    %v794 = vpack.c.b16 %v765, %v764
    %v795 = vpack.c.b16 %v767, %v766
    %v796 = vpack.c.b16 %v769, %v768
    %v797 = vpack.c.b16 %v771, %v770
    %v798 = vpack.c.b16 %v773, %v772
    %v799 = vpack.c.b16 %v775, %v774
    %v800 = vpack.c.b16 %v777, %v776
    %v801 = vpack.c.b16 %v779, %v778
    %v802 = vpack.c.b16 %v781, %v780
    %v803 = vpack.c.b16 %v783, %v782
    %v804 = vpack.c.b16 %v785, %v784
    %v805 = vpack.c.b16 %v787, %v786
    %v806 = vpack.c.b16 %v789, %v788
    %v807 = vpack.c.b16 %v791, %v790
    %824 = vmatprep.subr.bf16.mxu0 0
    %825 = vmatpush1.bf16.msra.mxu0 %v792
    %826 = vmatprep.subr.bf16.mxu0 0
    %827 = vmatpush1.bf16.msra.mxu0 %v793
    %828 = vmatprep.subr.bf16.mxu0 0
    %829 = vmatpush1.bf16.msra.mxu0 %v794
    %830 = vmatprep.subr.bf16.mxu0 0
    %831 = vmatpush1.bf16.msra.mxu0 %v795
    %832 = vmatprep.subr.bf16.mxu0 0
    %833 = vmatpush1.bf16.msra.mxu0 %v796
    %834 = vmatprep.subr.bf16.mxu0 0
    %835 = vmatpush1.bf16.msra.mxu0 %v797
    %836 = vmatprep.subr.bf16.mxu0 0
    %837 = vmatpush1.bf16.msra.mxu0 %v798
    %838 = vmatprep.subr.bf16.mxu0 0
    %839 = vmatpush1.bf16.msra.mxu0 %v799
    %840 = vmatprep.subr.bf16.mxu0 0
    %841 = vmatpush1.bf16.msra.mxu0 %v800
    %842 = vmatprep.subr.bf16.mxu0 0
    %843 = vmatpush1.bf16.msra.mxu0 %v801
    %844 = vmatprep.subr.bf16.mxu0 0
    %845 = vmatpush1.bf16.msra.mxu0 %v802
    %846 = vmatprep.subr.bf16.mxu0 0
    %847 = vmatpush1.bf16.msra.mxu0 %v803
    %848 = vmatprep.subr.bf16.mxu0 0
    %849 = vmatpush1.bf16.msra.mxu0 %v804
    %850 = vmatprep.subr.bf16.mxu0 0
    %851 = vmatpush1.bf16.msra.mxu0 %v805
    %852 = vmatprep.subr.bf16.mxu0 0
    %853 = vmatpush1.bf16.msra.mxu0 %v806
    %854 = vmatprep.subr.bf16.mxu0 0
    %855 = vmatpush1.bf16.msra.mxu0 %v807
    %856 = vmatprep.mubr.bf16.mxu0 %v674
    %857 = vmatmul.mubr.bf16.gmra.mrb[0].mxu0 %v673
    %v858 = vpop.f32.mrb[0].mxu0
    %v859 = vadd.f32 %v726, %v858
    %v860 = vpop.f32.mrb[0].mxu0
    %v861 = vpop.f32.mrb[0].mxu0
    %v862 = vadd.f32 %v726, %v861
    %v863 = vpop.f32.mrb[0].mxu0
    %864 = vmatprep.mubr.bf16.mxu0 %v676
    %865 = vmatmul.mubr.bf16.gmra.mrb[0].mxu0 %v675
    %v866 = vpop.f32.mrb[0].mxu0
    %v867 = vadd.f32 %v726, %v866
    %v868 = vpop.f32.mrb[0].mxu0
    %v869 = vpop.f32.mrb[0].mxu0
    %v870 = vadd.f32 %v726, %v869
    %v871 = vpop.f32.mrb[0].mxu0
    %872 = vmatprep.mubr.bf16.mxu0 %v678
    %873 = vmatmul.mubr.bf16.gmra.mrb[0].mxu0 %v677
    %v874 = vpop.f32.mrb[0].mxu0
    %v875 = vadd.f32 %v726, %v874
    %v876 = vpop.f32.mrb[0].mxu0
    %v877 = vpop.f32.mrb[0].mxu0
    %v878 = vadd.f32 %v726, %v877
    %v879 = vpop.f32.mrb[0].mxu0
    %880 = vmatprep.mubr.bf16.mxu0 %v680
    %881 = vmatmul.mubr.bf16.gmra.mrb[0].mxu0 %v679
    %v882 = vpop.f32.mrb[0].mxu0
    %v883 = vadd.f32 %v726, %v882
    %v884 = vpop.f32.mrb[0].mxu0
    %v885 = vpop.f32.mrb[0].mxu0
    %v886 = vadd.f32 %v726, %v885
    %v887 = vpop.f32.mrb[0].mxu0
    %888 = vmatprep.mubr.bf16.mxu0 %v682
    %889 = vmatmul.mubr.bf16.gmra.mrb[0].mxu0 %v681
    %v890 = vpop.f32.mrb[0].mxu0
    %v891 = vadd.f32 %v726, %v890
    %v892 = vpop.f32.mrb[0].mxu0
    %v893 = vpop.f32.mrb[0].mxu0
    %v894 = vadd.f32 %v726, %v893
    %v895 = vpop.f32.mrb[0].mxu0
    %896 = vmatprep.mubr.bf16.mxu0 %v684
    %897 = vmatmul.mubr.bf16.gmra.mrb[0].mxu0 %v683
    %v898 = vpop.f32.mrb[0].mxu0
    %v899 = vadd.f32 %v726, %v898
    %v900 = vpop.f32.mrb[0].mxu0
    %v901 = vpop.f32.mrb[0].mxu0
    %v902 = vadd.f32 %v726, %v901
    %v903 = vpop.f32.mrb[0].mxu0
    %904 = vmatprep.mubr.bf16.mxu0 %v686
    %905 = vmatmul.mubr.bf16.gmra.mrb[0].mxu0 %v685
    %v906 = vpop.f32.mrb[0].mxu0
    %v907 = vadd.f32 %v726, %v906
    %v908 = vpop.f32.mrb[0].mxu0
    %v909 = vpop.f32.mrb[0].mxu0
    %v910 = vadd.f32 %v726, %v909
    %v911 = vpop.f32.mrb[0].mxu0
    %912 = vmatprep.mubr.bf16.mxu0 %v688
    %913 = vmatmul.mubr.bf16.gmra.mrb[0].mxu0 %v687
    %v914 = vpop.f32.mrb[0].mxu0
    %v915 = vadd.f32 %v726, %v914
    %v916 = vpop.f32.mrb[0].mxu0
    %v917 = vpop.f32.mrb[0].mxu0
    %v918 = vadd.f32 %v726, %v917
    %v919 = vpop.f32.mrb[0].mxu0
    %920 = vdwg.mxu0
    %937 = vrot.lane.b32.xlu0 %v859, 120
    %v938 = vpop.permute.xlu0 %937
    %939 = vrot.lane.b32.xlu0 %v862, 120
    %v940 = vpop.permute.xlu0 %939
    %941 = vrot.lane.b32.xlu0 %v867, 120
    %v942 = vpop.permute.xlu0 %941
    %943 = vrot.lane.b32.xlu0 %v870, 120
    %v944 = vpop.permute.xlu0 %943
    %945 = vrot.lane.b32.xlu0 %v875, 120
    %v946 = vpop.permute.xlu0 %945
    %947 = vrot.lane.b32.xlu0 %v878, 120
    %v948 = vpop.permute.xlu0 %947
    %949 = vrot.lane.b32.xlu0 %v883, 120
    %v950 = vpop.permute.xlu0 %949
    %951 = vrot.lane.b32.xlu0 %v886, 120
    %v952 = vpop.permute.xlu0 %951
    %953 = vrot.lane.b32.xlu0 %v891, 120
    %v954 = vpop.permute.xlu0 %953
    %955 = vrot.lane.b32.xlu0 %v894, 120
    %v956 = vpop.permute.xlu0 %955
    %957 = vrot.lane.b32.xlu0 %v899, 120
    %v958 = vpop.permute.xlu0 %957
    %959 = vrot.lane.b32.xlu0 %v902, 120
    %v960 = vpop.permute.xlu0 %959
    %961 = vrot.lane.b32.xlu0 %v907, 120
    %v962 = vpop.permute.xlu0 %961
    %963 = vrot.lane.b32.xlu0 %v910, 120
    %v964 = vpop.permute.xlu0 %963
    %965 = vrot.lane.b32.xlu0 %v915, 120
    %v966 = vpop.permute.xlu0 %965
    %967 = vrot.lane.b32.xlu0 %v918, 120
    %v968 = vpop.permute.xlu0 %967
    %vm985 = vcmask 7168
    %v986 = vsel %vm985, %v938, 0.0
    %v987 = vsel %vm985, %v940, 0.0
    %v988 = vadd.f32 %v986, %v987
    %v989 = vsel %vm985, %v942, 0.0
    %v990 = vadd.f32 %v988, %v989
    %v991 = vsel %vm985, %v944, 0.0
    %v992 = vadd.f32 %v990, %v991
    %v993 = vsel %vm985, %v946, 0.0
    %v994 = vadd.f32 %v992, %v993
    %v995 = vsel %vm985, %v948, 0.0
    %v996 = vadd.f32 %v994, %v995
    %v997 = vsel %vm985, %v950, 0.0
    %v998 = vadd.f32 %v996, %v997
    %v999 = vsel %vm985, %v952, 0.0
    %v1000 = vadd.f32 %v998, %v999
    %v1001 = vsel %vm985, %v954, 0.0
    %v1002 = vadd.f32 %v1000, %v1001
    %v1003 = vsel %vm985, %v956, 0.0
    %v1004 = vadd.f32 %v1002, %v1003
    %v1005 = vsel %vm985, %v958, 0.0
    %v1006 = vadd.f32 %v1004, %v1005
    %v1007 = vsel %vm985, %v960, 0.0
    %v1008 = vadd.f32 %v1006, %v1007
    %v1009 = vsel %vm985, %v962, 0.0
    %v1010 = vadd.f32 %v1008, %v1009
    %v1011 = vsel %vm985, %v964, 0.0
    %v1012 = vadd.f32 %v1010, %v1011
    %v1013 = vsel %vm985, %v966, 0.0
    %v1014 = vadd.f32 %v1012, %v1013
    %v1015 = vsel %vm985, %v968, 0.0
    %v1016 = vadd.f32 %v1014, %v1015
    %1017 = vadd.xlane.f32.xlu0 %v1016
    %v1018 = vpop.xlane.xlu0 %1017
    %v1019 = vrot.slane %v1018, 4
    %v1020 = vadd.f32 %v1018, %v1019
    %v1021 = vrot.slane %v1020, 2
    %v1022 = vadd.f32 %v1020, %v1021
    %v1023 = vrot.slane %v1022, 1
    %v1024 = vadd.f32 %v1022, %v1023
    %s1025 = vtos %v1024
    %v1026 = vrcp.pop 128.0
    %s1027 = vtos %v1026
    %s1028 = smul.f32 %s1025, %s1027
    %v1029 = vstv %s1028
    %v1030 = vsub.f32 %v859, %v1029
    %v1031 = vsub.f32 %v862, %v1029
    %v1032 = vsub.f32 %v867, %v1029
    %v1033 = vsub.f32 %v870, %v1029
    %v1034 = vsub.f32 %v875, %v1029
    %v1035 = vsub.f32 %v878, %v1029
    %v1036 = vsub.f32 %v883, %v1029
    %v1037 = vsub.f32 %v886, %v1029
    %v1038 = vsub.f32 %v891, %v1029
    %v1039 = vsub.f32 %v894, %v1029
    %v1040 = vsub.f32 %v899, %v1029
    %v1041 = vsub.f32 %v902, %v1029
    %v1042 = vsub.f32 %v907, %v1029
    %v1043 = vsub.f32 %v910, %v1029
    %v1044 = vsub.f32 %v915, %v1029
    %v1045 = vsub.f32 %v918, %v1029
    %1046 = vst [vmem:[%s5] sm:$0xff] %v1030
    %1047 = vst [vmem:[%s5 + $0x8] sm:$0xff] %v1031
    %1048 = vst [vmem:[%s5 + $0x10] sm:$0xff] %v1032
    %1049 = vst [vmem:[%s5 + $0x18] sm:$0xff] %v1033
    %1050 = vst [vmem:[%s5 + $0x20] sm:$0xff] %v1034
    %1051 = vst [vmem:[%s5 + $0x28] sm:$0xff] %v1035
    %1052 = vst [vmem:[%s5 + $0x30] sm:$0xff] %v1036
    %1053 = vst [vmem:[%s5 + $0x38] sm:$0xff] %v1037
    %1054 = vst [vmem:[%s5 + $0x40] sm:$0xff] %v1038
    %1055 = vst [vmem:[%s5 + $0x48] sm:$0xff] %v1039
    %1056 = vst [vmem:[%s5 + $0x50] sm:$0xff] %v1040
    %1057 = vst [vmem:[%s5 + $0x58] sm:$0xff] %v1041
    %1058 = vst [vmem:[%s5 + $0x60] sm:$0xff] %v1042
    %1059 = vst [vmem:[%s5 + $0x68] sm:$0xff] %v1043
    %1060 = vst [vmem:[%s5 + $0x70] sm:$0xff] %v1044
    %1061 = vst [vmem:[%s5 + $0x78] sm:$0xff] %v1045
    // Predicated region
    $region26: #{duelling_dqn_forward.1} parent=1 // pred_check
      _
    $region27: #{duelling_dqn_forward.1} parent=1 // pred_check_branch
      %1063 = sbr.rel (0) target = $region29
    $region28: #{duelling_dqn_forward.1} parent=1 // pred_region
      _
    $region29: #{duelling_dqn_forward.1} parent=1 // pred_fallthru
      _
    // Predicated region
    $region30: #{duelling_dqn_forward.1} parent=1 // pred_check
      _
    $region31: #{duelling_dqn_forward.1} parent=1 // pred_check_branch
      %1065 = sbr.rel (0) target = $region33
    $region32: #{duelling_dqn_forward.1} parent=1 // pred_region
      _
    $region33: #{duelling_dqn_forward.1} parent=1 // pred_fallthru
      _
    %1066 = vsyncpa [#allocation3], 1

</llo_original>
